<compile_context>
chip_gen: v5e
topology: v5e:2x2
jax: 0.10.0
libtpu: 0.0.40
codegen_flags: <defaults>
</compile_context>

<pallas_src>
import functools

import jax
import jax.numpy as jnp
from jax import lax
from jax.experimental import pallas as pl
from jax.experimental.pallas import tpu as pltpu

_LANE = 128
_SUBLANE = 8


def _round_up(x: int, m: int) -> int:
    return ((x + m - 1) // m) * m


def _pick_row_block(n_pad: int) -> int:
    # Row-block size for the chained A^T DMA (reduction-dim slices).
    for b in (512, 256, 128):
        if n_pad % b == 0:
            return b
    return n_pad


def _vmem_capacity_bytes() -> int:
    # Generation-aware clamp target (v7x has only 64 MiB per TensorCore).
    try:
        return int(pltpu.get_tpu_info().vmem_capacity_bytes)
    except Exception:
        return 64 << 20  # conservative fallback, valid on every generation


def _ppr_kernel(x_ref, a_hbm, o_ref, a_vmem, sems, *,
                alpha: float, niter: int, blk: int, n_blocks: int,
                unroll: bool):
    # x_ref : (Fp, Np) f32 VMEM   transposed, padded local_preds
    # a_hbm : (Np, Np) bf16 HBM   transposed, padded, (1-alpha)-scaled A_hat
    # o_ref : (Fp, Np) f32 VMEM   transposed, padded preds after niter steps
    # a_vmem: (Np, Np) bf16 VMEM  single-buffered resident copy of A^T
    # sems  : DMA semaphores, one per row block of the A^T load

    # Kick off the whole A^T HBM->VMEM load as a chain of row-block DMAs.
    copies = [
        pltpu.make_async_copy(a_hbm.at[b * blk:(b + 1) * blk, :],
                              a_vmem.at[b * blk:(b + 1) * blk, :],
                              sems.at[b])
        for b in range(n_blocks)
    ]
    for c in copies:
        c.start()

    x = x_ref[...]                       # loop-invariant (Fp, Np) f32
    ax = alpha * x                       # hoisted axpy term (f32)
    x16 = x.astype(jnp.bfloat16)         # bf16 MXU operand for iteration 0

    # Iteration 0, overlapped with the A^T load: each row block of A^T is a
    # reduction-dim slice, so it contributes a partial product for every
    # output column; consume blocks as they land.
    preds = ax
    for b in range(n_blocks):
        copies[b].wait()
        preds = preds + jnp.dot(
            x16[:, b * blk:(b + 1) * blk],
            a_vmem[b * blk:(b + 1) * blk, :],
            preferred_element_type=jnp.float32)

    # Iterations 1..niter-1 on the now fully VMEM-resident A^T.  The matrix is
    # read through its ref each step (bounds vreg pressure at large Np).
    def body(_, p):
        return jnp.dot(p.astype(jnp.bfloat16), a_vmem[...],
                       preferred_element_type=jnp.float32) + ax

    o_ref[...] = lax.fori_loop(0, niter - 1, body, preds, unroll=unroll)


def prepare_a_hat(a_hat: jax.Array) -> jax.Array:
    """One-time preparation of the fixed module buffer `A_hat` (already scaled
    by (1-alpha)): transpose (the kernel runs the transposed recurrence
    preds_T <- preds_T @ A^T), zero-pad N up to a multiple of 128, and cast to
    bf16.  Amortize this across forward calls; doing it per call re-reads
    N^2*4B and writes N^2*2B of HBM for nothing."""
    n = a_hat.shape[0]
    n_pad = _round_up(n, _LANE)
    a_t = jnp.swapaxes(a_hat, 0, 1).astype(jnp.bfloat16)
    if n_pad != n:
        a_t = jnp.pad(a_t, ((0, n_pad - n), (0, n_pad - n)))
    return a_t


def ppr_power_iteration(a_t_prep: jax.Array, local_preds: jax.Array,
                        idx: jax.Array, *, alpha: float, niter: int) -> jax.Array:
    n, f = local_preds.shape
    n_pad = a_t_prep.shape[0]
    assert a_t_prep.shape == (n_pad, n_pad) and n_pad >= n
    assert n_pad % _LANE == 0 and a_t_prep.dtype == jnp.bfloat16

    if niter == 0:
        return local_preds[idx]

    # Sublane-pad F (second-minor dim of the transposed layout); the lane dim
    # of every VMEM operand and of the output is Np (multiple of 128), so all
    # matmul outputs / stores are lane-dense, unmasked vst.
    f_pad = _round_up(max(f, _SUBLANE), _SUBLANE)
    x_t = jnp.swapaxes(local_preds.astype(jnp.float32), 0, 1)
    x_t = jnp.pad(x_t, ((0, f_pad - f), (0, n_pad - n)))

    blk = _pick_row_block(n_pad)
    n_blocks = n_pad // blk
    unroll = bool(n_pad <= 2048 and niter <= 16)

    # Honest VMEM budget, clamped to the chip's physical capacity:
    #   single-buffered A^T scratch + in/out buffers + live f32 temps
    #   (x, ax, x16, fori carry, dot result) + fixed headroom.
    a_bytes = n_pad * n_pad * 2
    x_bytes = f_pad * n_pad * 4
    needed = a_bytes + 9 * x_bytes + (8 << 20)
    cap = _vmem_capacity_bytes()
    vmem_limit = int(min(max(needed, 32 << 20), cap - (4 << 20)))
    # TODO(synk): beyond the single-block ceiling (bf16 A^T no longer fits the
    # chip's VMEM minus working set, ~Np 5k on v7x / ~7.5k on v5e/v6e) switch
    # to a row-tiled streamed variant that re-streams A^T each iteration.

    kernel = functools.partial(_ppr_kernel, alpha=float(alpha),
                               niter=int(niter), blk=blk, n_blocks=n_blocks,
                               unroll=unroll)
    out_t = pl.pallas_call(
        kernel,
        out_shape=jax.ShapeDtypeStruct((f_pad, n_pad), jnp.float32),
        in_specs=[
            pl.BlockSpec((f_pad, n_pad), lambda: (0, 0)),   # x_T, VMEM
            pl.BlockSpec(memory_space=pl.ANY),              # A^T stays in HBM
        ],
        out_specs=pl.BlockSpec((f_pad, n_pad), lambda: (0, 0)),
        scratch_shapes=[
            pltpu.VMEM((n_pad, n_pad), jnp.bfloat16),       # resident A^T
            pltpu.SemaphoreType.DMA((n_blocks,)),
        ],
        compiler_params=pltpu.CompilerParams(vmem_limit_bytes=vmem_limit),
    )(x_t, a_t_prep)

    # TODO(synk): fold this node gather into the kernel output (scalar-prefetch
    # idx + |idx|-column output block) so the only HBM write is |idx|*Fp*4B.
    return jnp.take(out_t[:f, :n], idx, axis=1).T


def calc_a_hat_dense(adj: jnp.ndarray) -> jnp.ndarray:
    """Dense equivalent of calc_A_hat: D^{-1/2} (A + I) D^{-1/2}."""
    n = adj.shape[0]
    a = adj + jnp.eye(n, dtype=adj.dtype)
    d = jnp.sum(a, axis=1)
    d_invsqrt = 1.0 / jnp.sqrt(d)
    return (a * d_invsqrt[None, :]) * d_invsqrt[:, None]


if __name__ == "__main__":
    key = jax.random.PRNGKey(0)
    k_adj, k_pred = jax.random.split(key)

    N = 128          # graph nodes
    F = 32           # classes / feature dim of local predictions
    alpha = 0.1
    niter = 10

    # Deterministic synthetic symmetric 0/1 adjacency (no self loops).
    upper = (jax.random.uniform(k_adj, (N, N)) < 0.05).astype(jnp.float32)
    upper = jnp.triu(upper, k=1)
    adj = upper + upper.T

    a_hat = (1.0 - alpha) * calc_a_hat_dense(adj)          # module buffer 'A_hat'
    local_preds = jax.random.normal(k_pred, (N, F), dtype=jnp.float32)
    idx = jnp.arange(0, N, 4, dtype=jnp.int32)             # queried node subset

    a_prep = prepare_a_hat(a_hat)                          # one-time, amortized
    out = ppr_power_iteration(a_prep, local_preds, idx, alpha=alpha, niter=niter)
    out = jax.block_until_ready(out)
    assert out.shape == (idx.shape[0], F)

    # Reference 1: emulate the kernel's bf16 quantization (A_hat and the
    # per-step matmul operand rounded to bf16, f32 accumulation).
    a_q = a_hat.astype(jnp.bfloat16).astype(jnp.float32)
    preds_q = local_preds
    for _ in range(niter):
        p16 = preds_q.astype(jnp.bfloat16).astype(jnp.float32)
        preds_q = a_q @ p16 + alpha * local_preds
    ref_q = preds_q[idx]
    assert jnp.allclose(out, ref_q, atol=5e-3, rtol=5e-3), \
        "mismatch vs bf16-emulated reference"

    # Reference 2: pure f32 recurrence (exact module semantics), loose check
    # that the documented bf16 precision contract stays benign over niter.
    preds_f = local_preds
    for _ in range(niter):
        preds_f = a_hat @ preds_f + alpha * local_preds
    ref_f = preds_f[idx]
    assert jnp.allclose(out, ref_f, atol=1e-1, rtol=1e-1), \
        "mismatch vs f32 reference"

    print("KERNEL_OK")
</pallas_src>

<mosaic_0001>
module attributes {stable_mosaic.version = 11 : i64} {
  func.func @_ppr_kernel(%arg0: memref<32x128xf32, #tpu.memory_space<vmem>>, %arg1: memref<128x128xbf16, #tpu.memory_space<any>>, %arg2: memref<32x128xf32, #tpu.memory_space<vmem>>, %arg3: memref<128x128xbf16, #tpu.memory_space<vmem>>, %arg4: memref<1x!tpu.dma_semaphore, #tpu.memory_space<semaphore_mem>>) attributes {dimension_semantics = [], scalar_prefetch = 0 : i64, scratch_operands = 2 : i64, tpu.core_type = #tpu.core_type<tc>} {
    %c0_i32 = arith.constant 0 : i32
    %c0_i32_0 = arith.constant 0 : i32
    %c0_i32_1 = arith.constant 0 : i32
    %0 = tpu.memref_slice %arg1[%c0_i32_0, %c0_i32_1] : memref<128x128xbf16, #tpu.memory_space<any>> -> memref<128x128xbf16, #tpu.memory_space<any>>
    %c0_i32_2 = arith.constant 0 : i32
    %c0_i32_3 = arith.constant 0 : i32
    %1 = tpu.memref_slice %arg3[%c0_i32_2, %c0_i32_3] : memref<128x128xbf16, #tpu.memory_space<vmem>> -> memref<128x128xbf16, #tpu.memory_space<vmem>>
    %2 = tpu.memref_slice %arg4[%c0_i32] : memref<1x!tpu.dma_semaphore, #tpu.memory_space<semaphore_mem>> -> memref<1x!tpu.dma_semaphore, #tpu.memory_space<semaphore_mem>>
    %3 = tpu.memref_squeeze %2 : memref<1x!tpu.dma_semaphore, #tpu.memory_space<semaphore_mem>> -> memref<!tpu.dma_semaphore, #tpu.memory_space<semaphore_mem>>
    tpu.enqueue_dma source(%0 : memref<128x128xbf16, #tpu.memory_space<any>>) target(%1 : memref<128x128xbf16, #tpu.memory_space<vmem>>) target_semaphore(%3 : memref<!tpu.dma_semaphore, #tpu.memory_space<semaphore_mem>>)
    %c0 = arith.constant 0 : index
    %c0_4 = arith.constant 0 : index
    %4 = vector.load %arg0[%c0, %c0_4] : memref<32x128xf32, #tpu.memory_space<vmem>>, vector<32x128xf32>
    %cst = arith.constant 1.000000e-01 : f32
    %5 = vector.broadcast %cst : f32 to vector<32x128xf32>
    %6 = arith.mulf %5, %4 : vector<32x128xf32>
    %7 = arith.truncf %4 : vector<32x128xf32> to vector<32x128xbf16>
    %c0_i32_5 = arith.constant 0 : i32
    %c0_i32_6 = arith.constant 0 : i32
    %c0_i32_7 = arith.constant 0 : i32
    %8 = tpu.memref_slice %arg1[%c0_i32_6, %c0_i32_7] : memref<128x128xbf16, #tpu.memory_space<any>> -> memref<128x128xbf16, #tpu.memory_space<any>>
    %c0_i32_8 = arith.constant 0 : i32
    %c0_i32_9 = arith.constant 0 : i32
    %9 = tpu.memref_slice %arg3[%c0_i32_8, %c0_i32_9] : memref<128x128xbf16, #tpu.memory_space<vmem>> -> memref<128x128xbf16, #tpu.memory_space<vmem>>
    %10 = tpu.memref_slice %arg4[%c0_i32_5] : memref<1x!tpu.dma_semaphore, #tpu.memory_space<semaphore_mem>> -> memref<1x!tpu.dma_semaphore, #tpu.memory_space<semaphore_mem>>
    %11 = tpu.memref_squeeze %10 : memref<1x!tpu.dma_semaphore, #tpu.memory_space<semaphore_mem>> -> memref<!tpu.dma_semaphore, #tpu.memory_space<semaphore_mem>>
    tpu.wait_dma2 semaphore(%11 : memref<!tpu.dma_semaphore, #tpu.memory_space<semaphore_mem>>) src(%8 : memref<128x128xbf16, #tpu.memory_space<any>>) dst(%9 : memref<128x128xbf16, #tpu.memory_space<vmem>>)
    %c0_10 = arith.constant 0 : index
    %c0_11 = arith.constant 0 : index
    %12 = vector.load %arg3[%c0_10, %c0_11] : memref<128x128xbf16, #tpu.memory_space<vmem>>, vector<128x128xbf16>
    %cst_12 = arith.constant dense<0.000000e+00> : vector<32x128xf32>
    %13 = tpu.matmul %7, %12, %cst_12 {dimension_numbers = #tpu.dot_dimension_numbers<[1], [0], [0], [1], [0, 0, 1, 1], [], []>} : vector<32x128xbf16>, vector<128x128xbf16>, vector<32x128xf32> -> vector<32x128xf32>
    %14 = arith.addf %6, %13 : vector<32x128xf32>
    %c0_i32_13 = arith.constant 0 : i32
    %15 = arith.truncf %14 : vector<32x128xf32> to vector<32x128xbf16>
    %c0_14 = arith.constant 0 : index
    %c0_15 = arith.constant 0 : index
    %16 = vector.load %arg3[%c0_14, %c0_15] : memref<128x128xbf16, #tpu.memory_space<vmem>>, vector<128x128xbf16>
    %cst_16 = arith.constant dense<0.000000e+00> : vector<32x128xf32>
    %17 = tpu.matmul %15, %16, %cst_16 {dimension_numbers = #tpu.dot_dimension_numbers<[1], [0], [0], [1], [0, 0, 1, 1], [], []>} : vector<32x128xbf16>, vector<128x128xbf16>, vector<32x128xf32> -> vector<32x128xf32>
    %18 = arith.addf %17, %6 : vector<32x128xf32>
    %c1_i32 = arith.constant 1 : i32
    %19 = arith.truncf %18 : vector<32x128xf32> to vector<32x128xbf16>
    %c0_17 = arith.constant 0 : index
    %c0_18 = arith.constant 0 : index
    %20 = vector.load %arg3[%c0_17, %c0_18] : memref<128x128xbf16, #tpu.memory_space<vmem>>, vector<128x128xbf16>
    %cst_19 = arith.constant dense<0.000000e+00> : vector<32x128xf32>
    %21 = tpu.matmul %19, %20, %cst_19 {dimension_numbers = #tpu.dot_dimension_numbers<[1], [0], [0], [1], [0, 0, 1, 1], [], []>} : vector<32x128xbf16>, vector<128x128xbf16>, vector<32x128xf32> -> vector<32x128xf32>
    %22 = arith.addf %21, %6 : vector<32x128xf32>
    %c2_i32 = arith.constant 2 : i32
    %23 = arith.truncf %22 : vector<32x128xf32> to vector<32x128xbf16>
    %c0_20 = arith.constant 0 : index
    %c0_21 = arith.constant 0 : index
    %24 = vector.load %arg3[%c0_20, %c0_21] : memref<128x128xbf16, #tpu.memory_space<vmem>>, vector<128x128xbf16>
    %cst_22 = arith.constant dense<0.000000e+00> : vector<32x128xf32>
    %25 = tpu.matmul %23, %24, %cst_22 {dimension_numbers = #tpu.dot_dimension_numbers<[1], [0], [0], [1], [0, 0, 1, 1], [], []>} : vector<32x128xbf16>, vector<128x128xbf16>, vector<32x128xf32> -> vector<32x128xf32>
    %26 = arith.addf %25, %6 : vector<32x128xf32>
    %c3_i32 = arith.constant 3 : i32
    %27 = arith.truncf %26 : vector<32x128xf32> to vector<32x128xbf16>
    %c0_23 = arith.constant 0 : index
    %c0_24 = arith.constant 0 : index
    %28 = vector.load %arg3[%c0_23, %c0_24] : memref<128x128xbf16, #tpu.memory_space<vmem>>, vector<128x128xbf16>
    %cst_25 = arith.constant dense<0.000000e+00> : vector<32x128xf32>
    %29 = tpu.matmul %27, %28, %cst_25 {dimension_numbers = #tpu.dot_dimension_numbers<[1], [0], [0], [1], [0, 0, 1, 1], [], []>} : vector<32x128xbf16>, vector<128x128xbf16>, vector<32x128xf32> -> vector<32x128xf32>
    %30 = arith.addf %29, %6 : vector<32x128xf32>
    %c4_i32 = arith.constant 4 : i32
    %31 = arith.truncf %30 : vector<32x128xf32> to vector<32x128xbf16>
    %c0_26 = arith.constant 0 : index
    %c0_27 = arith.constant 0 : index
    %32 = vector.load %arg3[%c0_26, %c0_27] : memref<128x128xbf16, #tpu.memory_space<vmem>>, vector<128x128xbf16>
    %cst_28 = arith.constant dense<0.000000e+00> : vector<32x128xf32>
    %33 = tpu.matmul %31, %32, %cst_28 {dimension_numbers = #tpu.dot_dimension_numbers<[1], [0], [0], [1], [0, 0, 1, 1], [], []>} : vector<32x128xbf16>, vector<128x128xbf16>, vector<32x128xf32> -> vector<32x128xf32>
    %34 = arith.addf %33, %6 : vector<32x128xf32>
    %c5_i32 = arith.constant 5 : i32
    %35 = arith.truncf %34 : vector<32x128xf32> to vector<32x128xbf16>
    %c0_29 = arith.constant 0 : index
    %c0_30 = arith.constant 0 : index
    %36 = vector.load %arg3[%c0_29, %c0_30] : memref<128x128xbf16, #tpu.memory_space<vmem>>, vector<128x128xbf16>
    %cst_31 = arith.constant dense<0.000000e+00> : vector<32x128xf32>
    %37 = tpu.matmul %35, %36, %cst_31 {dimension_numbers = #tpu.dot_dimension_numbers<[1], [0], [0], [1], [0, 0, 1, 1], [], []>} : vector<32x128xbf16>, vector<128x128xbf16>, vector<32x128xf32> -> vector<32x128xf32>
    %38 = arith.addf %37, %6 : vector<32x128xf32>
    %c6_i32 = arith.constant 6 : i32
    %39 = arith.truncf %38 : vector<32x128xf32> to vector<32x128xbf16>
    %c0_32 = arith.constant 0 : index
    %c0_33 = arith.constant 0 : index
    %40 = vector.load %arg3[%c0_32, %c0_33] : memref<128x128xbf16, #tpu.memory_space<vmem>>, vector<128x128xbf16>
    %cst_34 = arith.constant dense<0.000000e+00> : vector<32x128xf32>
    %41 = tpu.matmul %39, %40, %cst_34 {dimension_numbers = #tpu.dot_dimension_numbers<[1], [0], [0], [1], [0, 0, 1, 1], [], []>} : vector<32x128xbf16>, vector<128x128xbf16>, vector<32x128xf32> -> vector<32x128xf32>
    %42 = arith.addf %41, %6 : vector<32x128xf32>
    %c7_i32 = arith.constant 7 : i32
    %43 = arith.truncf %42 : vector<32x128xf32> to vector<32x128xbf16>
    %c0_35 = arith.constant 0 : index
    %c0_36 = arith.constant 0 : index
    %44 = vector.load %arg3[%c0_35, %c0_36] : memref<128x128xbf16, #tpu.memory_space<vmem>>, vector<128x128xbf16>
    %cst_37 = arith.constant dense<0.000000e+00> : vector<32x128xf32>
    %45 = tpu.matmul %43, %44, %cst_37 {dimension_numbers = #tpu.dot_dimension_numbers<[1], [0], [0], [1], [0, 0, 1, 1], [], []>} : vector<32x128xbf16>, vector<128x128xbf16>, vector<32x128xf32> -> vector<32x128xf32>
    %46 = arith.addf %45, %6 : vector<32x128xf32>
    %c8_i32 = arith.constant 8 : i32
    %47 = arith.truncf %46 : vector<32x128xf32> to vector<32x128xbf16>
    %c0_38 = arith.constant 0 : index
    %c0_39 = arith.constant 0 : index
    %48 = vector.load %arg3[%c0_38, %c0_39] : memref<128x128xbf16, #tpu.memory_space<vmem>>, vector<128x128xbf16>
    %cst_40 = arith.constant dense<0.000000e+00> : vector<32x128xf32>
    %49 = tpu.matmul %47, %48, %cst_40 {dimension_numbers = #tpu.dot_dimension_numbers<[1], [0], [0], [1], [0, 0, 1, 1], [], []>} : vector<32x128xbf16>, vector<128x128xbf16>, vector<32x128xf32> -> vector<32x128xf32>
    %50 = arith.addf %49, %6 : vector<32x128xf32>
    %c0_41 = arith.constant 0 : index
    %c0_42 = arith.constant 0 : index
    %51 = vector.load %arg2[%c0_41, %c0_42] : memref<32x128xf32, #tpu.memory_space<vmem>>, vector<32x128xf32>
    tpu.vector_store %arg2[%c0_41, %c0_42], %50 {strides = array<i32>} : memref<32x128xf32, #tpu.memory_space<vmem>>, vector<32x128xf32>,
    return
  }
}

</mosaic_0001>

<llo_original>
// kernel: tpu_custom_call.1
$region0: #{tpu_custom_call.1}
  #allocation0 [shape = 'u32[]', space=smem, size = 0x4, offset = 0x4, fixed_abs, tag = 'smem constant byte address 0x4 - core index']
  #allocation1 [shape = 'u32[72,128]{1,0:T(1,128)}', space=vmem, size = 0x9000, scoped, tag = 'internal scratch']
  #allocation2 [shape = 'bf16[128,128]{1,0:T(8,128)(2,1)}', space=vmem, size = 0x8000, scoped, tag = 'scratch operand']
  #allocation3 [shape = 's32[1]{0}', space=sflag, size = 0x4, scoped, tag = 'scratch operand']
  #allocation8 [shape = 's32[]', space=sflag, size = 0x4, offset = 0, fixed_abs, tag = 'sflag constant byte address 0x0 - dummy sync flag']
  #allocation9 [shape = 's32[]', space=sflag, size = 0x4, offset = 0, fixed_abs, tag = 'sflag constant byte address 0x0 - dummy sync flag']
  #allocation10 [shape = 'u32[]', space=smem, size = 0x4, offset = 0x44, fixed_abs, tag = 'smem constant byte address 0x44 - assertion arg 0']
  #allocation11 [shape = 'u32[]', space=smem, size = 0x4, offset = 0x48, fixed_abs, tag = 'smem constant byte address 0x48 - assertion arg 1']
  %s0 = inlined_call_operand.hbm [shape: f32[32,128], index: 0, kind: input, shape index: {}]
  %s1 = inlined_call_operand.hbm [shape: bf16[128,128], index: 1, kind: input, shape index: {}]
  %s2 = inlined_call_operand.hbm [shape: f32[32,128], index: 2, kind: output, shape index: {}]
  %s3 = sld [smem:[#allocation0]]
  $region22: #{tpu_custom_call.1} parent=0
    _
  %s5 = ssub.s32 1, %s3
  %s6 = scalar_select 0, %s5, %s3
  $region1: #{tpu_custom_call.1} parent=0
    #allocation4 [shape = 'u8[16384]{0}', space=vmem, size = 0x4000, scoped, tag = 'input window, operand 0, single buffered']
    #allocation5 [shape = 's32[1]{0}', space=sflag, size = 0x4, scoped, tag = 'scoped memory for tpu_custom_call.1']
    #allocation6 [shape = 's32[1]{0}', space=sflag, size = 0x4, scoped, tag = 'scoped memory for tpu_custom_call.1']
    #allocation7 [shape = 'u8[16384]{0}', space=vmem, size = 0x4000, scoped, tag = 'output window, operand 0, single buffered']
    %7 = vsyncpa [#allocation5], 0
    %8 = vsyncpa [#allocation6], 0
    // Predicated region
    $region2: #{tpu_custom_call.1} parent=1 // pred_check
      _
    $region3: #{tpu_custom_call.1} parent=1 // pred_check_branch
      %10 = sbr.rel (0) target = $region5
    $region4: #{tpu_custom_call.1} parent=1 // pred_region
      %12 = vsyncadd [#allocation5], 0
      %s13 = sshll.u32 %s0, 4
      %s14 = int_to_ptr.hbm [resolvable:$true] %s13
      %s15 = sshll.u32 [#allocation4], 4
      %s16 = int_to_ptr.vmem [resolvable:$true] %s15
      %21 = dma.hbm_to_vmem [thread:$0]  %s14, 512, %s16, [#allocation5], 128, 128, 8
    $region5: #{tpu_custom_call.1} parent=1 // pred_fallthru
      _
    // Predicated region
    $region6: #{tpu_custom_call.1} parent=1 // pred_check
      _
    $region7: #{tpu_custom_call.1} parent=1 // pred_check_branch
      %23 = sbr.rel (0) target = $region9
    $region8: #{tpu_custom_call.1} parent=1 // pred_region
      %25 = dma.done [#allocation5], 512
    $region9: #{tpu_custom_call.1} parent=1 // pred_fallthru
      _
    // Predicated region
    $region10: #{tpu_custom_call.1} parent=1 // pred_check
      _
    $region11: #{tpu_custom_call.1} parent=1 // pred_check_branch
      %27 = sbr.rel target = $region13
    $region12: #{tpu_custom_call.1} parent=1 // pred_region
      %28 = sst [smem:[#allocation10]] [#allocation9]
      %29 = sst [smem:[#allocation11]] [#allocation8]
    $region13: #{tpu_custom_call.1} parent=1 // pred_fallthru
      _
    %31 = shalt.err (0)
    %s33 = sshll.u32 %s1, 4
    %s34 = int_to_ptr.hbm [resolvable:$true] %s33
    %s35 = sshll.u32 [#allocation2], 4
    %s36 = int_to_ptr.vmem [resolvable:$true] %s35
    %38 = dma.hbm_to_vmem [thread:$0]  %s34, 1024, %s36, [#allocation3]
    %v39 = vld [vmem:[#allocation4] sm:$0xff]
    %v40 = vld [vmem:[#allocation4 + $0x8] sm:$0xff]
    %v41 = vld [vmem:[#allocation4 + $0x10] sm:$0xff]
    %v42 = vld [vmem:[#allocation4 + $0x18] sm:$0xff]
    %v43 = vmul.f32 %v39, 0.1
    %v44 = vmul.f32 %v40, 0.1
    %v45 = vmul.f32 %v41, 0.1
    %v46 = vmul.f32 %v42, 0.1
    %v47 = vpack.c.bf16 %v40, %v39
    %v48 = vpack.c.bf16 %v42, %v41
    %s49 = smul.u32 4, 16
    %s50 = smul.u32 %s49, 1
    %s51 = sshll.u32 %s50, 4
    %52 = dma.done [#allocation3], %s51
    %v53 = vld [vmem:[#allocation2] sm:$0xf]
    %v54 = vld [vmem:[#allocation2 + $0x4] sm:$0xf]
    %v55 = vld [vmem:[#allocation2 + $0x8] sm:$0xf]
    %v56 = vld [vmem:[#allocation2 + $0xc] sm:$0xf]
    %v57 = vld [vmem:[#allocation2 + $0x10] sm:$0xf]
    %v58 = vld [vmem:[#allocation2 + $0x14] sm:$0xf]
    %v59 = vld [vmem:[#allocation2 + $0x18] sm:$0xf]
    %v60 = vld [vmem:[#allocation2 + $0x1c] sm:$0xf]
    %v61 = vld [vmem:[#allocation2 + $0x20] sm:$0xf]
    %v62 = vld [vmem:[#allocation2 + $0x24] sm:$0xf]
    %v63 = vld [vmem:[#allocation2 + $0x28] sm:$0xf]
    %v64 = vld [vmem:[#allocation2 + $0x2c] sm:$0xf]
    %v65 = vld [vmem:[#allocation2 + $0x30] sm:$0xf]
    %v66 = vld [vmem:[#allocation2 + $0x34] sm:$0xf]
    %v67 = vld [vmem:[#allocation2 + $0x38] sm:$0xf]
    %v68 = vld [vmem:[#allocation2 + $0x3c] sm:$0xf]
    %v85 = vunpack.c.l.b16 %v53
    %v86 = vunpack.c.l.b16 %v54
    %v87 = vunpack.c.l.b16 %v55
    %v88 = vunpack.c.l.b16 %v56
    %v89 = vunpack.c.l.b16 %v57
    %v90 = vunpack.c.l.b16 %v58
    %v91 = vunpack.c.l.b16 %v59
    %v92 = vunpack.c.l.b16 %v60
    %v93 = vunpack.c.l.b16 %v61
    %v94 = vunpack.c.l.b16 %v62
    %v95 = vunpack.c.l.b16 %v63
    %v96 = vunpack.c.l.b16 %v64
    %v97 = vunpack.c.l.b16 %v65
    %v98 = vunpack.c.l.b16 %v66
    %v99 = vunpack.c.l.b16 %v67
    %v100 = vunpack.c.l.b16 %v68
    %v101 = vpack.c.b16 %v86, %v85
    %v102 = vpack.c.b16 %v88, %v87
    %v103 = vpack.c.b16 %v90, %v89
    %v104 = vpack.c.b16 %v92, %v91
    %v105 = vpack.c.b16 %v94, %v93
    %v106 = vpack.c.b16 %v96, %v95
    %v107 = vpack.c.b16 %v98, %v97
    %v108 = vpack.c.b16 %v100, %v99
    %117 = vmatpush.bf16.msra.mxu0 %v108
    %118 = vmatpush.bf16.msra.mxu0 %v107
    %119 = vmatpush.bf16.msra.mxu0 %v106
    %120 = vmatpush.bf16.msra.mxu0 %v105
    %121 = vmatpush.bf16.msra.mxu0 %v104
    %122 = vmatpush.bf16.msra.mxu0 %v103
    %123 = vmatpush.bf16.msra.mxu0 %v102
    %124 = vmatpush.bf16.msra.mxu0 %v101
    %125 = vmatmul.bf16.gmra.mxu0 %v47
    %v126 = vpop.f32.mrf.mxu0
    %v127 = vadd.f32 0.0, %v126
    %v128 = vpop.f32.mrf.mxu0
    %v129 = vadd.f32 0.0, %v128
    %130 = vmatmul.bf16.gmra.mxu0 %v48
    %v131 = vpop.f32.mrf.mxu0
    %v132 = vadd.f32 0.0, %v131
    %v133 = vpop.f32.mrf.mxu0
    %v134 = vadd.f32 0.0, %v133
    %135 = vdwg.mxu0
    %v136 = vadd.f32 %v43, %v127
    %v137 = vadd.f32 %v44, %v129
    %v138 = vadd.f32 %v45, %v132
    %v139 = vadd.f32 %v46, %v134
    %v140 = vpack.c.bf16 %v137, %v136
    %v141 = vpack.c.bf16 %v139, %v138
    %142 = vmatpush.bf16.msra.mxu0 %v108
    %143 = vmatpush.bf16.msra.mxu0 %v107
    %144 = vmatpush.bf16.msra.mxu0 %v106
    %145 = vmatpush.bf16.msra.mxu0 %v105
    %146 = vmatpush.bf16.msra.mxu0 %v104
    %147 = vmatpush.bf16.msra.mxu0 %v103
    %148 = vmatpush.bf16.msra.mxu0 %v102
    %149 = vmatpush.bf16.msra.mxu0 %v101
    %150 = vmatmul.bf16.gmra.mxu0 %v140
    %v151 = vpop.f32.mrf.mxu0
    %v152 = vadd.f32 %v43, %v151
    %v153 = vpop.f32.mrf.mxu0
    %v154 = vadd.f32 %v44, %v153
    %155 = vmatmul.bf16.gmra.mxu0 %v141
    %v156 = vpop.f32.mrf.mxu0
    %v157 = vadd.f32 %v45, %v156
    %v158 = vpop.f32.mrf.mxu0
    %v159 = vadd.f32 %v46, %v158
    %160 = vdwg.mxu0
    %v161 = vpack.c.bf16 %v154, %v152
    %v162 = vpack.c.bf16 %v159, %v157
    %163 = vmatpush.bf16.msra.mxu0 %v108
    %164 = vmatpush.bf16.msra.mxu0 %v107
    %165 = vmatpush.bf16.msra.mxu0 %v106
    %166 = vmatpush.bf16.msra.mxu0 %v105
    %167 = vmatpush.bf16.msra.mxu0 %v104
    %168 = vmatpush.bf16.msra.mxu0 %v103
    %169 = vmatpush.bf16.msra.mxu0 %v102
    %170 = vmatpush.bf16.msra.mxu0 %v101
    %171 = vmatmul.bf16.gmra.mxu0 %v161
    %v172 = vpop.f32.mrf.mxu0
    %v173 = vadd.f32 %v43, %v172
    %v174 = vpop.f32.mrf.mxu0
    %v175 = vadd.f32 %v44, %v174
    %176 = vmatmul.bf16.gmra.mxu0 %v162
    %v177 = vpop.f32.mrf.mxu0
    %v178 = vadd.f32 %v45, %v177
    %v179 = vpop.f32.mrf.mxu0
    %v180 = vadd.f32 %v46, %v179
    %181 = vdwg.mxu0
    %v182 = vpack.c.bf16 %v175, %v173
    %v183 = vpack.c.bf16 %v180, %v178
    %184 = vmatpush.bf16.msra.mxu0 %v108
    %185 = vmatpush.bf16.msra.mxu0 %v107
    %186 = vmatpush.bf16.msra.mxu0 %v106
    %187 = vmatpush.bf16.msra.mxu0 %v105
    %188 = vmatpush.bf16.msra.mxu0 %v104
    %189 = vmatpush.bf16.msra.mxu0 %v103
    %190 = vmatpush.bf16.msra.mxu0 %v102
    %191 = vmatpush.bf16.msra.mxu0 %v101
    %192 = vmatmul.bf16.gmra.mxu0 %v182
    %v193 = vpop.f32.mrf.mxu0
    %v194 = vadd.f32 %v43, %v193
    %v195 = vpop.f32.mrf.mxu0
    %v196 = vadd.f32 %v44, %v195
    %197 = vmatmul.bf16.gmra.mxu0 %v183
    %v198 = vpop.f32.mrf.mxu0
    %v199 = vadd.f32 %v45, %v198
    %v200 = vpop.f32.mrf.mxu0
    %v201 = vadd.f32 %v46, %v200
    %202 = vdwg.mxu0
    %v203 = vpack.c.bf16 %v196, %v194
    %v204 = vpack.c.bf16 %v201, %v199
    %205 = vmatpush.bf16.msra.mxu0 %v108
    %206 = vmatpush.bf16.msra.mxu0 %v107
    %207 = vmatpush.bf16.msra.mxu0 %v106
    %208 = vmatpush.bf16.msra.mxu0 %v105
    %209 = vmatpush.bf16.msra.mxu0 %v104
    %210 = vmatpush.bf16.msra.mxu0 %v103
    %211 = vmatpush.bf16.msra.mxu0 %v102
    %212 = vmatpush.bf16.msra.mxu0 %v101
    %213 = vmatmul.bf16.gmra.mxu0 %v203
    %v214 = vpop.f32.mrf.mxu0
    %v215 = vadd.f32 %v43, %v214
    %v216 = vpop.f32.mrf.mxu0
    %v217 = vadd.f32 %v44, %v216
    %218 = vmatmul.bf16.gmra.mxu0 %v204
    %v219 = vpop.f32.mrf.mxu0
    %v220 = vadd.f32 %v45, %v219
    %v221 = vpop.f32.mrf.mxu0
    %v222 = vadd.f32 %v46, %v221
    %223 = vdwg.mxu0
    %v224 = vpack.c.bf16 %v217, %v215
    %v225 = vpack.c.bf16 %v222, %v220
    %226 = vmatpush.bf16.msra.mxu0 %v108
    %227 = vmatpush.bf16.msra.mxu0 %v107
    %228 = vmatpush.bf16.msra.mxu0 %v106
    %229 = vmatpush.bf16.msra.mxu0 %v105
    %230 = vmatpush.bf16.msra.mxu0 %v104
    %231 = vmatpush.bf16.msra.mxu0 %v103
    %232 = vmatpush.bf16.msra.mxu0 %v102
    %233 = vmatpush.bf16.msra.mxu0 %v101
    %234 = vmatmul.bf16.gmra.mxu0 %v224
    %v235 = vpop.f32.mrf.mxu0
    %v236 = vadd.f32 %v43, %v235
    %v237 = vpop.f32.mrf.mxu0
    %v238 = vadd.f32 %v44, %v237
    %239 = vmatmul.bf16.gmra.mxu0 %v225
    %v240 = vpop.f32.mrf.mxu0
    %v241 = vadd.f32 %v45, %v240
    %v242 = vpop.f32.mrf.mxu0
    %v243 = vadd.f32 %v46, %v242
    %244 = vdwg.mxu0
    %v245 = vpack.c.bf16 %v238, %v236
    %v246 = vpack.c.bf16 %v243, %v241
    %247 = vmatpush.bf16.msra.mxu0 %v108
    %248 = vmatpush.bf16.msra.mxu0 %v107
    %249 = vmatpush.bf16.msra.mxu0 %v106
    %250 = vmatpush.bf16.msra.mxu0 %v105
    %251 = vmatpush.bf16.msra.mxu0 %v104
    %252 = vmatpush.bf16.msra.mxu0 %v103
    %253 = vmatpush.bf16.msra.mxu0 %v102
    %254 = vmatpush.bf16.msra.mxu0 %v101
    %255 = vmatmul.bf16.gmra.mxu0 %v245
    %v256 = vpop.f32.mrf.mxu0
    %v257 = vadd.f32 %v43, %v256
    %v258 = vpop.f32.mrf.mxu0
    %v259 = vadd.f32 %v44, %v258
    %260 = vmatmul.bf16.gmra.mxu0 %v246
    %v261 = vpop.f32.mrf.mxu0
    %v262 = vadd.f32 %v45, %v261
    %v263 = vpop.f32.mrf.mxu0
    %v264 = vadd.f32 %v46, %v263
    %265 = vdwg.mxu0
    %v266 = vpack.c.bf16 %v259, %v257
    %v267 = vpack.c.bf16 %v264, %v262
    %268 = vmatpush.bf16.msra.mxu0 %v108
    %269 = vmatpush.bf16.msra.mxu0 %v107
    %270 = vmatpush.bf16.msra.mxu0 %v106
    %271 = vmatpush.bf16.msra.mxu0 %v105
    %272 = vmatpush.bf16.msra.mxu0 %v104
    %273 = vmatpush.bf16.msra.mxu0 %v103
    %274 = vmatpush.bf16.msra.mxu0 %v102
    %275 = vmatpush.bf16.msra.mxu0 %v101
    %276 = vmatmul.bf16.gmra.mxu0 %v266
    %v277 = vpop.f32.mrf.mxu0
    %v278 = vadd.f32 %v43, %v277
    %v279 = vpop.f32.mrf.mxu0
    %v280 = vadd.f32 %v44, %v279
    %281 = vmatmul.bf16.gmra.mxu0 %v267
    %v282 = vpop.f32.mrf.mxu0
    %v283 = vadd.f32 %v45, %v282
    %v284 = vpop.f32.mrf.mxu0
    %v285 = vadd.f32 %v46, %v284
    %286 = vdwg.mxu0
    %v287 = vpack.c.bf16 %v280, %v278
    %v288 = vpack.c.bf16 %v285, %v283
    %289 = vmatpush.bf16.msra.mxu0 %v108
    %290 = vmatpush.bf16.msra.mxu0 %v107
    %291 = vmatpush.bf16.msra.mxu0 %v106
    %292 = vmatpush.bf16.msra.mxu0 %v105
    %293 = vmatpush.bf16.msra.mxu0 %v104
    %294 = vmatpush.bf16.msra.mxu0 %v103
    %295 = vmatpush.bf16.msra.mxu0 %v102
    %296 = vmatpush.bf16.msra.mxu0 %v101
    %297 = vmatmul.bf16.gmra.mxu0 %v287
    %v298 = vpop.f32.mrf.mxu0
    %v299 = vadd.f32 %v43, %v298
    %v300 = vpop.f32.mrf.mxu0
    %v301 = vadd.f32 %v44, %v300
    %302 = vmatmul.bf16.gmra.mxu0 %v288
    %v303 = vpop.f32.mrf.mxu0
    %v304 = vadd.f32 %v45, %v303
    %v305 = vpop.f32.mrf.mxu0
    %v306 = vadd.f32 %v46, %v305
    %307 = vdwg.mxu0
    %v308 = vpack.c.bf16 %v301, %v299
    %v309 = vpack.c.bf16 %v306, %v304
    %310 = vmatpush.bf16.msra.mxu0 %v108
    %311 = vmatpush.bf16.msra.mxu0 %v107
    %312 = vmatpush.bf16.msra.mxu0 %v106
    %313 = vmatpush.bf16.msra.mxu0 %v105
    %314 = vmatpush.bf16.msra.mxu0 %v104
    %315 = vmatpush.bf16.msra.mxu0 %v103
    %316 = vmatpush.bf16.msra.mxu0 %v102
    %317 = vmatpush.bf16.msra.mxu0 %v101
    %318 = vmatmul.bf16.gmra.mxu0 %v308
    %v319 = vpop.f32.mrf.mxu0
    %v320 = vadd.f32 %v43, %v319
    %v321 = vpop.f32.mrf.mxu0
    %v322 = vadd.f32 %v44, %v321
    %323 = vmatmul.bf16.gmra.mxu0 %v309
    %v324 = vpop.f32.mrf.mxu0
    %v325 = vadd.f32 %v45, %v324
    %v326 = vpop.f32.mrf.mxu0
    %v327 = vadd.f32 %v46, %v326
    %328 = vdwg.mxu0
    %329 = vst [vmem:[#allocation7] sm:$0xff] %v320
    %330 = vst [vmem:[#allocation7 + $0x8] sm:$0xff] %v322
    %331 = vst [vmem:[#allocation7 + $0x10] sm:$0xff] %v325
    %332 = vst [vmem:[#allocation7 + $0x18] sm:$0xff] %v327
    // Predicated region
    $region14: #{tpu_custom_call.1} parent=1 // pred_check
      _
    $region15: #{tpu_custom_call.1} parent=1 // pred_check_branch
      %334 = sbr.rel (0) target = $region17
    $region16: #{tpu_custom_call.1} parent=1 // pred_region
      %336 = vsyncadd [#allocation6], 0
      %s337 = sshll.u32 [#allocation7], 4
      %s338 = int_to_ptr.vmem [resolvable:$true] %s337
      %s339 = sshll.u32 %s2, 4
      %s340 = int_to_ptr.hbm [resolvable:$true] %s339
      %345 = dma.vmem_to_hbm [thread:$0]  %s338, 512, %s340, [#allocation6], 128, 128, 8
    $region17: #{tpu_custom_call.1} parent=1 // pred_fallthru
      _
    // Predicated region
    $region18: #{tpu_custom_call.1} parent=1 // pred_check
      _
    $region19: #{tpu_custom_call.1} parent=1 // pred_check_branch
      %347 = sbr.rel (0) target = $region21
    $region20: #{tpu_custom_call.1} parent=1 // pred_region
      %349 = dma.done [#allocation6], 512
    $region21: #{tpu_custom_call.1} parent=1 // pred_fallthru
      _
    %350 = vsyncpa [#allocation5], 1
    %351 = vsyncpa [#allocation6], 1
  %352 = vsyncmov [#allocation3]
  %s353 = vpop.sfrf %352
  %p354 = scmp.eq.s32.totalorder %s353, 0
  %p355 = pneg %p354
  %357 = shalt.err (%p355)

</llo_original>
